<compile_context>
chip_gen: v5e
topology: v5e:2x2
jax: 0.10.0
libtpu: 0.0.40
codegen_flags: <defaults>
</compile_context>

<pallas_src>
import functools
import math

import jax
import jax.numpy as jnp
from jax.experimental import pallas as pl
from jax.experimental.pallas import tpu as pltpu


def _tv_kernel(mask_ref, x_ref, out_h_ref, out_w_ref, *,
               w, hc, hw, b_total, tb, b_ragged, hw_ragged, compute_dtype):
    # x_ref: (tb, hc) block -- tb flattened image rows x one H*W chunk,
    # lane-dense last dim.
    x = x_ref[...].astype(compute_dtype)

    if hw_ragged:  # static flag: tail chunk extends past H*W (stale-VMEM lanes)
        q = (jax.lax.broadcasted_iota(jnp.int32, (1, hc), 1)
             + pl.program_id(1) * hc)
        # Select (not multiply): NaN/Inf garbage in padding lanes must not
        # propagate via 0 * NaN.
        x = jnp.where(q < hw, x, 0.0)

    # Neighbor values via XLU rotations (jnp.roll semantics, positive shifts):
    #   x_down[i]  = x[(i + w) % hc]  -> pixel one image-row below (same column)
    #   x_right[i] = x[(i + 1) % hc]  -> pixel one column to the right
    x_down = pltpu.roll(x, hc - w, 1)
    x_right = pltpu.roll(x, hc - 1, 1)

    # Seam handling is one fmul by resident precomputed per-lane masks
    # (row 0: zero on the last row of the chunk; row 1: zero on column W-1).
    dh = jnp.abs(x_down - x) * mask_ref[0:1, :]
    dw = jnp.abs(x_right - x) * mask_ref[1:2, :]

    if hw_ragged:
        # Last valid image row of the tail chunk: its in-chunk "down" neighbor
        # is padding -> drop those vertical terms.
        dh = jnp.where(q + w < hw, dh, 0.0)

    if b_ragged:  # static flag: only traced when B % tb != 0
        row = (jax.lax.broadcasted_iota(jnp.int32, (tb, 1), 0)
               + pl.program_id(0) * tb)
        valid = row < b_total
        dh = jnp.where(valid, dh, 0.0)
        dw = jnp.where(valid, dw, 0.0)

    # Per-block partial sums (f32 accumulation), written as scalar-filled
    # (8,128) output tiles so out_specs satisfy the (8,128) tiling rule.
    out_h_ref[...] = jnp.full((8, 128), jnp.sum(dh, dtype=jnp.float32),
                              dtype=jnp.float32)
    out_w_ref[...] = jnp.full((8, 128), jnp.sum(dw, dtype=jnp.float32),
                              dtype=jnp.float32)


def _select_config():
    """(target_block_bytes, vmem_limit_bytes), picked per TPU generation."""
    vmem_cap = 64 * 1024 * 1024          # conservative default: v7x per-TC VMEM
    try:
        cap = getattr(pltpu.get_tpu_info(), "vmem_capacity_bytes", None)
        if cap:
            vmem_cap = int(cap)
    except Exception:
        pass
    if vmem_cap >= 100 * 1024 * 1024:    # v5e / v6e class: 128 MiB VMEM
        return 8 * 1024 * 1024, 96 * 1024 * 1024
    return 4 * 1024 * 1024, 48 * 1024 * 1024   # v7x class: 64 MiB per TC


def _choose_tiling(b, h, w, itemsize, target_bytes):
    """Returns (tb, hc): batch rows per block and flattened-chunk lane length."""
    hw = h * w
    sub = 16 if itemsize == 2 else 8     # sublane multiple (bf16 packs 2 rows)
    row_bytes = hw * itemsize
    tb_min = b if b < sub else sub

    if row_bytes * tb_min <= target_bytes:
        # Flat path: one chunk spans the whole flattened image.
        tb = max(1, target_bytes // row_bytes)
        if b <= sub:
            tb = b
        else:
            tb = max(sub, (min(tb, b) // sub) * sub)
            if tb >= b and b >= 2 * sub:
                # Keep >= 2 grid steps so both v7x TensorCores get work.
                tb = max(sub, ((b // 2) // sub) * sub)
        return tb, hw

    # Chunked path (very large H*W): tile the flattened row into chunks that
    # are whole image rows AND a multiple of 128 lanes.
    tb = tb_min
    r0 = 128 // math.gcd(w, 128)         # rows/chunk must be a multiple of r0
    rows_budget = max(1, target_bytes // max(1, w * itemsize * tb))
    rpc = max(r0, (rows_budget // r0) * r0)
    if rpc >= h:
        # TODO(synk): H < 128/gcd(W,128) with an enormous W would also need
        # column chunking; fall back to a single (possibly large) chunk.
        return tb, hw
    return tb, rpc * w


def tv_loss(img: jax.Array) -> jax.Array:
    """Pallas TV loss matching nn.L1Loss-based TVLoss.forward (mean reduction)."""
    n, c, h, w = img.shape
    b = n * c
    hw = h * w
    x = img.reshape(b, hw)               # contiguous: one lane-dense row/image

    itemsize = jnp.dtype(img.dtype).itemsize
    compute_dtype = img.dtype if img.dtype == jnp.bfloat16 else jnp.float32

    target_bytes, vmem_limit = _select_config()
    tb, hc = _choose_tiling(b, h, w, itemsize, target_bytes)

    nb = pl.cdiv(b, tb)
    nch = pl.cdiv(hw, hc)
    b_ragged = (b % tb) != 0
    hw_ragged = (hw % hc) != 0

    # Chunk-invariant multiply masks, resident in VMEM for the whole grid:
    #   row 0 (vertical): zero on the last row of each chunk
    #   row 1 (horizontal): zero on column W-1
    idx = jnp.arange(hc, dtype=jnp.int32)
    hmask = (idx + w < hc).astype(compute_dtype)
    wmask = ((idx % w) != (w - 1)).astype(compute_dtype)
    masks = jnp.stack([hmask, wmask], axis=0)          # (2, hc)

    kernel = functools.partial(
        _tv_kernel, w=w, hc=hc, hw=hw, b_total=b, tb=tb,
        b_ragged=b_ragged, hw_ragged=hw_ragged, compute_dtype=compute_dtype)

    part_h, part_w = pl.pallas_call(
        kernel,
        out_shape=(
            jax.ShapeDtypeStruct((nb * 8, nch * 128), jnp.float32),
            jax.ShapeDtypeStruct((nb * 8, nch * 128), jnp.float32),
        ),
        grid_spec=pltpu.PrefetchScalarGridSpec(
            num_scalar_prefetch=0,
            grid=(nb, nch),                            # b outer, chunk inner
            in_specs=[
                pl.BlockSpec((2, hc), lambda bi, ci: (0, 0)),    # masks (resident)
                pl.BlockSpec((tb, hc), lambda bi, ci: (bi, ci)),  # image chunk
            ],
            out_specs=[
                pl.BlockSpec((8, 128), lambda bi, ci: (bi, ci)),
                pl.BlockSpec((8, 128), lambda bi, ci: (bi, ci)),
            ],
        ),
        compiler_params=pltpu.CompilerParams(
            dimension_semantics=("parallel", "parallel"),  # no carried state
            vmem_limit_bytes=vmem_limit,
        ),
        cost_estimate=pl.CostEstimate(
            flops=6 * b * hw,
            bytes_accessed=(b * hw * itemsize + 2 * hc * itemsize
                            + nb * nch * 8 * 128 * 8),
            transcendentals=0,
        ),
    )(masks, x)

    sum_h = jnp.sum(part_h[::8, ::128], dtype=jnp.float32)
    sum_w = jnp.sum(part_w[::8, ::128], dtype=jnp.float32)

    if nch > 1:
        # Cross-chunk vertical diffs (last row of chunk k vs first row of
        # chunk k+1): only B * W * (nch - 1) elements, added in plain JAX.
        rpc = hc // w
        bnd = jnp.arange(rpc - 1, h - 1, rpc)
        x3 = x.reshape(b, h, w)
        d = (x3[:, bnd + 1, :].astype(compute_dtype)
             - x3[:, bnd, :].astype(compute_dtype))
        sum_h = sum_h + jnp.sum(jnp.abs(d), dtype=jnp.float32)

    # nn.L1Loss uses mean reduction over each difference tensor separately.
    # (H==1 or W==1 gives an empty diff tensor -> NaN, same as PyTorch.)
    n_h = b * (h - 1) * w
    n_w = b * h * (w - 1)
    return sum_h / n_h + sum_w / n_w


def tv_loss_ref(img: jax.Array) -> jax.Array:
    """Pure-JAX reference for correctness checking."""
    dh = jnp.mean(jnp.abs(img[:, :, 1:, :] - img[:, :, :-1, :]))
    dw = jnp.mean(jnp.abs(img[:, :, :, 1:] - img[:, :, :, :-1]))
    return dh + dw


if __name__ == "__main__":
    key = jax.random.PRNGKey(0)
    # small NCHW image: batch=2, channels=4, spatial=16x16
    img = jax.random.normal(key, (2, 4, 16, 16), dtype=jnp.float32)

    out = jax.block_until_ready(tv_loss(img))
    ref = tv_loss_ref(img)
    assert jnp.allclose(out, ref, rtol=1e-5, atol=1e-5), (out, ref)

    print("KERNEL_OK")
</pallas_src>

<mosaic_0001>
module attributes {stable_mosaic.version = 11 : i64} {
  func.func @_tv_kernel(%arg0: i32, %arg1: i32, %arg2: memref<2x256xf32, #tpu.memory_space<vmem>>, %arg3: memref<8x256xf32, #tpu.memory_space<vmem>>, %arg4: memref<8x128xf32, #tpu.memory_space<vmem>>, %arg5: memref<8x128xf32, #tpu.memory_space<vmem>>) attributes {dimension_semantics = [#tpu.dimension_semantics<parallel>, #tpu.dimension_semantics<parallel>], iteration_bounds = array<i64: 1, 1>, scalar_prefetch = 0 : i64, scratch_operands = 0 : i64, tpu.core_type = #tpu.core_type<tc>, window_params = [{pipeline_mode = #tpu.pipeline_mode<synchronous>, transform_indices = @transform_0, window_bounds = array<i64: 2, 256>}, {transform_indices = @transform_1, window_bounds = array<i64: 8, 256>}, {transform_indices = @transform_2, window_bounds = array<i64: 8, 128>}, {transform_indices = @transform_3, window_bounds = array<i64: 8, 128>}]} {
    %c0 = arith.constant 0 : index
    %c0_0 = arith.constant 0 : index
    %0 = vector.load %arg3[%c0, %c0_0] : memref<8x256xf32, #tpu.memory_space<vmem>>, vector<8x256xf32>
    %c240_i32 = arith.constant 240 : i32
    %1 = tpu.dynamic_rotate %0 by %c240_i32 dim 1 : vector<8x256xf32>, i32 -> vector<8x256xf32>
    %c255_i32 = arith.constant 255 : i32
    %2 = tpu.dynamic_rotate %0 by %c255_i32 dim 1 : vector<8x256xf32>, i32 -> vector<8x256xf32>
    %3 = arith.subf %1, %0 : vector<8x256xf32>
    %4 = math.absf %3 : vector<8x256xf32>
    %c0_1 = arith.constant 0 : index
    %c0_2 = arith.constant 0 : index
    %5 = vector.load %arg2[%c0_1, %c0_2] : memref<2x256xf32, #tpu.memory_space<vmem>>, vector<1x256xf32>
    %6 = vector.broadcast %5 : vector<1x256xf32> to vector<8x256xf32>
    %7 = arith.mulf %4, %6 : vector<8x256xf32>
    %8 = arith.subf %2, %0 : vector<8x256xf32>
    %9 = math.absf %8 : vector<8x256xf32>
    %c1 = arith.constant 1 : index
    %c0_3 = arith.constant 0 : index
    %10 = vector.load %arg2[%c1, %c0_3] : memref<2x256xf32, #tpu.memory_space<vmem>>, vector<1x256xf32>
    %11 = vector.broadcast %10 : vector<1x256xf32> to vector<8x256xf32>
    %12 = arith.mulf %9, %11 : vector<8x256xf32>
    %13 = vector.shape_cast %7 : vector<8x256xf32> to vector<1x8x256xf32>
    %cst = arith.constant dense<0.000000e+00> : vector<1xf32>
    %14 = vector.multi_reduction <add>, %13, %cst [1, 2] : vector<1x8x256xf32> to vector<1xf32>
    %15 = vector.shape_cast %14 : vector<1xf32> to vector<1x1x1xf32>
    %16 = vector.extract %15[0, 0, 0] : f32 from vector<1x1x1xf32>
    %17 = vector.broadcast %16 : f32 to vector<8x128xf32>
    %c0_4 = arith.constant 0 : index
    %c0_5 = arith.constant 0 : index
    %18 = vector.load %arg4[%c0_4, %c0_5] : memref<8x128xf32, #tpu.memory_space<vmem>>, vector<8x128xf32>
    tpu.vector_store %arg4[%c0_4, %c0_5], %17 {strides = array<i32>} : memref<8x128xf32, #tpu.memory_space<vmem>>, vector<8x128xf32>,
    %19 = vector.shape_cast %12 : vector<8x256xf32> to vector<1x8x256xf32>
    %cst_6 = arith.constant dense<0.000000e+00> : vector<1xf32>
    %20 = vector.multi_reduction <add>, %19, %cst_6 [1, 2] : vector<1x8x256xf32> to vector<1xf32>
    %21 = vector.shape_cast %20 : vector<1xf32> to vector<1x1x1xf32>
    %22 = vector.extract %21[0, 0, 0] : f32 from vector<1x1x1xf32>
    %23 = vector.broadcast %22 : f32 to vector<8x128xf32>
    %c0_7 = arith.constant 0 : index
    %c0_8 = arith.constant 0 : index
    %24 = vector.load %arg5[%c0_7, %c0_8] : memref<8x128xf32, #tpu.memory_space<vmem>>, vector<8x128xf32>
    tpu.vector_store %arg5[%c0_7, %c0_8], %23 {strides = array<i32>} : memref<8x128xf32, #tpu.memory_space<vmem>>, vector<8x128xf32>,
    return
  }
  func.func @transform_0(%arg0: i32, %arg1: i32) -> (i32, i32) {
    %c0_i32 = arith.constant 0 : i32
    %c0_i32_0 = arith.constant 0 : i32
    %c0_i32_1 = arith.constant 0 : i32
    return %c0_i32, %c0_i32_0 : i32, i32
  }
  func.func @transform_1(%arg0: i32, %arg1: i32) -> (i32, i32) {
    %c0_i32 = arith.constant 0 : i32
    return %arg0, %arg1 : i32, i32
  }
  func.func @transform_2(%arg0: i32, %arg1: i32) -> (i32, i32) {
    %c0_i32 = arith.constant 0 : i32
    return %arg0, %arg1 : i32, i32
  }
  func.func @transform_3(%arg0: i32, %arg1: i32) -> (i32, i32) {
    %c0_i32 = arith.constant 0 : i32
    return %arg0, %arg1 : i32, i32
  }
}

</mosaic_0001>

<llo_original>
// kernel: tpu_custom_call.1
$region0: #{tpu_custom_call.1}
  #allocation0 [shape = 'u32[]', space=smem, size = 0x4, offset = 0x4, fixed_abs, tag = 'smem constant byte address 0x4 - core index']
  #allocation1 [shape = 'u32[72,128]{1,0:T(1,128)}', space=vmem, size = 0x9000, scoped, tag = 'internal scratch']
  %s0 = inlined_call_operand.hbm [shape: f32[2,256], index: 0, kind: input, shape index: {}]
  %s1 = inlined_call_operand.hbm [shape: f32[8,256], index: 1, kind: input, shape index: {}]
  %s2 = inlined_call_operand.hbm [shape: f32[8,128], index: 2, kind: output, shape index: {0}]
  %s3 = inlined_call_operand.hbm [shape: f32[8,128], index: 3, kind: output, shape index: {1}]
  %4 = xla_tuple %s2, %s3
  %s5 = sld [smem:[#allocation0]]
  $region34: #{tpu_custom_call.1} parent=0
    _
  %s7 = ssub.s32 1, %s5
  %s8 = scalar_select 0, %s7, %s5
  $region1: #{tpu_custom_call.1} parent=0
    #allocation2 [shape = 'u8[2048]{0}', space=vmem, size = 0x800, scoped, tag = 'input window, operand 0, single buffered']
    #allocation3 [shape = 's32[1]{0}', space=sflag, size = 0x4, scoped, tag = 'scoped memory for tpu_custom_call.1']
    #allocation4 [shape = 's32[1]{0}', space=sflag, size = 0x4, scoped, tag = 'scoped memory for tpu_custom_call.1']
    #allocation5 [shape = 'u8[8192]{0}', space=vmem, size = 0x2000, scoped, tag = 'input window, operand 1, single buffered']
    #allocation6 [shape = 's32[1]{0}', space=sflag, size = 0x4, scoped, tag = 'scoped memory for tpu_custom_call.1']
    #allocation7 [shape = 'u8[4096]{0}', space=vmem, size = 0x1000, scoped, tag = 'output window, operand 0, single buffered']
    #allocation8 [shape = 'u8[4096]{0}', space=vmem, size = 0x1000, scoped, tag = 'output window, operand 1, single buffered']
    #allocation9 [shape = 's32[1]{0}', space=sflag, size = 0x4, scoped, tag = 'scoped memory for tpu_custom_call.1']
    %9 = vsyncpa [#allocation3], 0
    %10 = vsyncpa [#allocation6], 0
    %11 = vsyncpa [#allocation4], 0
    %12 = vsyncpa [#allocation9], 0
    // Predicated region
    $region2: #{tpu_custom_call.1} parent=1 // pred_check
      _
    $region3: #{tpu_custom_call.1} parent=1 // pred_check_branch
      %14 = sbr.rel (0) target = $region5
    $region4: #{tpu_custom_call.1} parent=1 // pred_region
      %16 = vsyncadd [#allocation3], 0
      %s18 = sshll.u32 %s0, 4
      %s19 = int_to_ptr.hbm [resolvable:$true] %s18
      %s20 = sshll.u32 [#allocation2], 4
      %s21 = int_to_ptr.vmem [resolvable:$true] %s20
      %23 = dma.hbm_to_vmem [thread:$0]  %s19, 64, %s21, [#allocation3]
    $region5: #{tpu_custom_call.1} parent=1 // pred_fallthru
      _
    // Predicated region
    $region6: #{tpu_custom_call.1} parent=1 // pred_check
      _
    $region7: #{tpu_custom_call.1} parent=1 // pred_check_branch
      %25 = sbr.rel (0) target = $region9
    $region8: #{tpu_custom_call.1} parent=1 // pred_region
      %27 = vsyncadd [#allocation6], 0
      %s29 = sshll.u32 %s1, 4
      %s30 = int_to_ptr.hbm [resolvable:$true] %s29
      %s31 = sshll.u32 [#allocation5], 4
      %s32 = int_to_ptr.vmem [resolvable:$true] %s31
      %34 = dma.hbm_to_vmem [thread:$0]  %s30, 256, %s32, [#allocation6]
    $region9: #{tpu_custom_call.1} parent=1 // pred_fallthru
      _
    // Predicated region
    $region10: #{tpu_custom_call.1} parent=1 // pred_check
      _
    $region11: #{tpu_custom_call.1} parent=1 // pred_check_branch
      %36 = sbr.rel (0) target = $region13
    $region12: #{tpu_custom_call.1} parent=1 // pred_region
      %38 = dma.done [#allocation3], 64
    $region13: #{tpu_custom_call.1} parent=1 // pred_fallthru
      _
    // Predicated region
    $region14: #{tpu_custom_call.1} parent=1 // pred_check
      _
    $region15: #{tpu_custom_call.1} parent=1 // pred_check_branch
      %40 = sbr.rel (0) target = $region17
    $region16: #{tpu_custom_call.1} parent=1 // pred_region
      %42 = dma.done [#allocation6], 256
    $region17: #{tpu_custom_call.1} parent=1 // pred_fallthru
      _
    %v43 = vld [vmem:[#allocation5] sm:$0xff]
    %v44 = vld [vmem:[#allocation5 + $0x8] sm:$0xff]
    %45 = vrot.lane.b32.xlu0 %v43, 112
    %v46 = vpop.permute.xlu0 %45
    %47 = vrot.lane.b32.xlu0 %v44, 112
    %v48 = vpop.permute.xlu0 %47
    %v49 = vlaneseq
    %v50 = vand.u32 %v49, 127
    %vm51 = vcmp.lt.s32.totalorder %v50, 112
    %v52 = vsel %vm51, %v46, %v48
    %v53 = vsel %vm51, %v48, %v46
    %54 = vrot.lane.b32.xlu0 %v43, 127
    %v55 = vpop.permute.xlu0 %54
    %56 = vrot.lane.b32.xlu0 %v44, 127
    %v57 = vpop.permute.xlu0 %56
    %vm58 = vcmp.lt.s32.totalorder %v50, 127
    %v59 = vsel %vm58, %v55, %v57
    %v60 = vsel %vm58, %v57, %v55
    %v61 = vsub.f32 %v52, %v43
    %v62 = vsub.f32 %v53, %v44
    %v63 = vand.u32 2147483647, %v61
    %v64 = vand.u32 2147483647, %v62
    %v65 = vld [vmem:[#allocation2] ss:$2 sm:$0x3]
    %v67 = vperm.slane %v65, 0
    %v68 = vperm.slane %v65, 1
    %v71 = vmul.f32 %v63, %v67
    %v72 = vmul.f32 %v64, %v68
    %v73 = vsub.f32 %v59, %v43
    %v74 = vsub.f32 %v60, %v44
    %v75 = vand.u32 2147483647, %v73
    %v76 = vand.u32 2147483647, %v74
    %s77 = scalar_lea.vmem [#allocation2], 1
    %v78 = vld [vmem:[%s77] ss:$2 sm:$0x3]
    %v80 = vperm.slane %v78, 0
    %v81 = vperm.slane %v78, 1
    %v84 = vmul.f32 %v75, %v80
    %v85 = vmul.f32 %v76, %v81
    %v86 = vadd.f32 %v71, %v72
    %87 = vadd.xlane.f32.xlu0 %v86
    %v88 = vpop.xlane.xlu0 %87
    %v89 = vrot.slane %v88, 4
    %v90 = vadd.f32 %v88, %v89
    %v91 = vrot.slane %v90, 2
    %v92 = vadd.f32 %v90, %v91
    %v93 = vrot.slane %v92, 1
    %v94 = vadd.f32 %v92, %v93
    %s95 = vtos %v94
    %v96 = vstv %s95
    %97 = vst [vmem:[#allocation7] sm:$0xff] %v96
    %v98 = vadd.f32 %v84, %v85
    %99 = vadd.xlane.f32.xlu0 %v98
    %v100 = vpop.xlane.xlu0 %99
    %v101 = vrot.slane %v100, 4
    %v102 = vadd.f32 %v100, %v101
    %v103 = vrot.slane %v102, 2
    %v104 = vadd.f32 %v102, %v103
    %v105 = vrot.slane %v104, 1
    %v106 = vadd.f32 %v104, %v105
    %s107 = vtos %v106
    %v108 = vstv %s107
    %109 = vst [vmem:[#allocation8] sm:$0xff] %v108
    // Predicated region
    $region18: #{tpu_custom_call.1} parent=1 // pred_check
      _
    $region19: #{tpu_custom_call.1} parent=1 // pred_check_branch
      %111 = sbr.rel (0) target = $region21
    $region20: #{tpu_custom_call.1} parent=1 // pred_region
      %113 = vsyncadd [#allocation4], 0
      %s115 = sshll.u32 [#allocation7], 4
      %s116 = int_to_ptr.vmem [resolvable:$true] %s115
      %s117 = sshll.u32 %s2, 4
      %s118 = int_to_ptr.hbm [resolvable:$true] %s117
      %120 = dma.vmem_to_hbm [thread:$0]  %s116, 128, %s118, [#allocation4]
    $region21: #{tpu_custom_call.1} parent=1 // pred_fallthru
      _
    // Predicated region
    $region22: #{tpu_custom_call.1} parent=1 // pred_check
      _
    $region23: #{tpu_custom_call.1} parent=1 // pred_check_branch
      %122 = sbr.rel (0) target = $region25
    $region24: #{tpu_custom_call.1} parent=1 // pred_region
      %124 = vsyncadd [#allocation9], 0
      %s126 = sshll.u32 [#allocation8], 4
      %s127 = int_to_ptr.vmem [resolvable:$true] %s126
      %s128 = sshll.u32 %s3, 4
      %s129 = int_to_ptr.hbm [resolvable:$true] %s128
      %131 = dma.vmem_to_hbm [thread:$0]  %s127, 128, %s129, [#allocation9]
    $region25: #{tpu_custom_call.1} parent=1 // pred_fallthru
      _
    // Predicated region
    $region26: #{tpu_custom_call.1} parent=1 // pred_check
      _
    $region27: #{tpu_custom_call.1} parent=1 // pred_check_branch
      %133 = sbr.rel (0) target = $region29
    $region28: #{tpu_custom_call.1} parent=1 // pred_region
      %135 = dma.done [#allocation4], 128
    $region29: #{tpu_custom_call.1} parent=1 // pred_fallthru
      _
    // Predicated region
    $region30: #{tpu_custom_call.1} parent=1 // pred_check
      _
    $region31: #{tpu_custom_call.1} parent=1 // pred_check_branch
      %137 = sbr.rel (0) target = $region33
    $region32: #{tpu_custom_call.1} parent=1 // pred_region
      %139 = dma.done [#allocation9], 128
    $region33: #{tpu_custom_call.1} parent=1 // pred_fallthru
      _
    %140 = vsyncpa [#allocation3], 1
    %141 = vsyncpa [#allocation6], 1
    %142 = vsyncpa [#allocation4], 1
    %143 = vsyncpa [#allocation9], 1

</llo_original>
